<compile_context>
chip_gen: v7x
topology: tpu7x:2x2x1
jax: 0.10.0
libtpu: 0.0.40
codegen_flags: <defaults>
</compile_context>

<pallas_src>
import functools
import math

import jax
import jax.numpy as jnp
from jax.experimental import pallas as pl
from jax.experimental.pallas import tpu as pltpu

_EPS = 1e-5
_ACT_DTYPE = jnp.bfloat16            # activations / weights in bf16, f32 accumulation


def _default_vmem_limit():
    # ~3/4 of physical VMEM (128 MiB on v5e/v6e, 64 MiB per TC on v7x), capped at 96 MiB.
    try:
        phys = pltpu.get_tpu_info().vmem_capacity_bytes
        return int(min(phys * 3 // 4, 96 * 1024 * 1024))
    except Exception:
        return 48 * 1024 * 1024      # safe on every generation


_VMEM_LIMIT = _default_vmem_limit()


# ---------------------------------------------------------------------------
# tiling helpers
# ---------------------------------------------------------------------------
def _cpad(c):
    """Pad a channel count up to a multiple of 128 (full vreg lane width)."""
    return ((c + 127) // 128) * 128


def _mtile(m, target=512):
    """Row (second-minor) tile: a multiple of 8 dividing m, or the full m."""
    if m <= target:
        return m
    for t in range(target, 7, -8):
        if m % t == 0:
            return t
    return m


def _div_tile(n, target):
    t = min(n, max(1, target))
    while t > 1 and n % t:
        t -= 1
    return max(t, 1)


def _row_block(h, w, target=256, cap=8):
    """Output rows per 3x3-conv grid step: smallest divisor of h with rb*w >= target."""
    divs = [d for d in range(1, min(h, cap) + 1) if h % d == 0]
    for d in divs:
        if d * w >= target:
            return d
    return divs[-1]


def _cparams(sem):
    return pltpu.CompilerParams(dimension_semantics=sem,
                                vmem_limit_bytes=_VMEM_LIMIT)


# ---------------------------------------------------------------------------
# in-kernel helpers
# ---------------------------------------------------------------------------
def _bn_coeffs(s_ref, g_ref, b_ref, count, eps=_EPS):
    """Per-channel (scale, shift) of a training-mode BatchNorm from (sum, sumsq)."""
    mean = s_ref[0:1, :] / count
    var = s_ref[1:2, :] / count - mean * mean
    scale = g_ref[...] * jax.lax.rsqrt(var + eps)
    shift = b_ref[...] - mean * scale
    return scale, shift


# ---------------------------------------------------------------------------
# kernels
# ---------------------------------------------------------------------------
def _conv_mm_plain_kernel(a_ref, b_ref, y_ref, st_ref):
    acc = jnp.dot(a_ref[...], b_ref[...], preferred_element_type=jnp.float32)
    y_ref[...] = acc.astype(y_ref.dtype)
    st_ref[0, 0:1, :] = jnp.sum(acc, axis=0, keepdims=True)
    st_ref[0, 1:2, :] = jnp.sum(acc * acc, axis=0, keepdims=True)


def _conv_mm_prologue_kernel(a_ref, b_ref, g_ref, bt_ref, s_ref, y_ref, st_ref,
                             *, count_in, eps=_EPS):
    # BN + ReLU of the producer conv, applied on the fly to this A tile.
    scale, shift = _bn_coeffs(s_ref, g_ref, bt_ref, count_in, eps)
    a = jnp.maximum(a_ref[...].astype(jnp.float32) * scale + shift, 0.0)
    acc = jnp.dot(a.astype(jnp.bfloat16), b_ref[...],
                  preferred_element_type=jnp.float32)
    y_ref[...] = acc.astype(y_ref.dtype)
    st_ref[0, 0:1, :] = jnp.sum(acc, axis=0, keepdims=True)
    st_ref[0, 1:2, :] = jnp.sum(acc * acc, axis=0, keepdims=True)


def _conv3x3_kernel(x_ref, w_ref, g_ref, bt_ref, s_ref, y_ref, st_ref,
                    *, H, W, RB, count_in, eps=_EPS):
    """3x3 / stride-1 / pad-1 conv.  Whole padded image + full weight slab are
    VMEM-resident (constant block index); each step produces RB output rows."""
    r = pl.program_id(1)
    cpad = x_ref.shape[-1]
    cout = y_ref.shape[-1]

    # Prologue: BN + ReLU of the producing conv on the (RB+2)-row halo slab, then
    # re-zero the spatial padding (the BN shift would otherwise leak into it).
    scale, shift = _bn_coeffs(s_ref, g_ref, bt_ref, count_in, eps)
    x = x_ref[pl.ds(r * RB, RB + 2), :, :].astype(jnp.float32)     # (RB+2, W+2, C)
    x = jnp.maximum(x * scale.reshape(1, 1, -1) + shift.reshape(1, 1, -1), 0.0)
    row = jax.lax.broadcasted_iota(jnp.int32, x.shape, 0) + r * RB
    col = jax.lax.broadcasted_iota(jnp.int32, x.shape, 1)
    valid = (row >= 1) & (row <= H) & (col >= 1) & (col <= W)
    xb = jnp.where(valid, x, 0.0).astype(jnp.bfloat16)

    # TODO(synk): collapse the (RB, W) dims into one big-M matmul per tap once Mosaic
    # reshape of (RB, W, C) -> (RB*W, C) is confirmed safe for W % 8 != 0.
    s1 = jnp.zeros((1, cout), jnp.float32)
    s2 = jnp.zeros((1, cout), jnp.float32)
    for ii in range(RB):
        acc = jnp.zeros((W, cout), jnp.float32)
        for di in range(3):
            xrow = xb[di + ii]                                      # (W+2, C)
            for dj in range(3):
                tap = di * 3 + dj
                acc = acc + jnp.dot(xrow[dj:dj + W, :],
                                    w_ref[tap * cpad:(tap + 1) * cpad, :],
                                    preferred_element_type=jnp.float32)
        y_ref[ii, :, :] = acc.astype(y_ref.dtype)
        s1 = s1 + jnp.sum(acc, axis=0, keepdims=True)
        s2 = s2 + jnp.sum(acc * acc, axis=0, keepdims=True)
    st_ref[0, 0:1, :] = s1
    st_ref[0, 1:2, :] = s2


def _stats_reduce_kernel(x_ref, o_ref):
    o_ref[...] = jnp.sum(x_ref[...], axis=0)


def _pool_plain_kernel(xa_ref, xb_ref, o_ref):
    rs = xa_ref[...].astype(jnp.float32) + xb_ref[...].astype(jnp.float32)  # (TR, W, C)
    wo = o_ref.shape[1]
    for jo in range(wo):
        o_ref[:, jo, :] = ((rs[:, 2 * jo, :] + rs[:, 2 * jo + 1, :]) * 0.25
                           ).astype(o_ref.dtype)


def _pool_bn_relu_kernel(xa_ref, xb_ref, g_ref, bt_ref, s_ref, o_ref,
                         *, count_in, eps=_EPS):
    scale, shift = _bn_coeffs(s_ref, g_ref, bt_ref, count_in, eps)
    scale = scale.reshape(1, 1, -1)
    shift = shift.reshape(1, 1, -1)
    xa = jnp.maximum(xa_ref[...].astype(jnp.float32) * scale + shift, 0.0)
    xb = jnp.maximum(xb_ref[...].astype(jnp.float32) * scale + shift, 0.0)
    rs = xa + xb                                                     # (TR, W, C)
    wo = o_ref.shape[1]
    for jo in range(wo):
        o_ref[:, jo, :] = ((rs[:, 2 * jo, :] + rs[:, 2 * jo + 1, :]) * 0.25
                           ).astype(o_ref.dtype)


def _bn_add_relu_kernel(y_ref, s_ref, g_ref, b_ref, i_ref, o_ref, *, count_a, eps=_EPS):
    scale, shift = _bn_coeffs(s_ref, g_ref, b_ref, count_a, eps)
    out = y_ref[...].astype(jnp.float32) * scale + shift + i_ref[...].astype(jnp.float32)
    o_ref[...] = jnp.maximum(out, 0.0).astype(o_ref.dtype)


def _bn_bn_add_relu_kernel(ya_ref, sa_ref, ga_ref, ba_ref,
                           yb_ref, sb_ref, gb_ref, bb_ref, o_ref,
                           *, count_a, count_b, eps=_EPS):
    sca, sha = _bn_coeffs(sa_ref, ga_ref, ba_ref, count_a, eps)
    scb, shb = _bn_coeffs(sb_ref, gb_ref, bb_ref, count_b, eps)
    out = (ya_ref[...].astype(jnp.float32) * sca + sha
           + yb_ref[...].astype(jnp.float32) * scb + shb)
    o_ref[...] = jnp.maximum(out, 0.0).astype(o_ref.dtype)


def _linear_kernel(a_ref, b_ref, bias_ref, o_ref):
    acc = jnp.dot(a_ref[...], b_ref[...], preferred_element_type=jnp.float32)
    o_ref[...] = (acc + bias_ref[...]).astype(o_ref.dtype)


def _mean_pos_kernel(xs_ref, pos_ref, o_ref):
    xs = xs_ref[...]                       # (L, N, C) f32
    pos = pos_ref[...]                     # (L+1, C)  f32, broadcast over N in VMEM
    o_ref[1:, :, :] = xs + pos[1:, :][:, None, :]
    o_ref[0:1, :, :] = jnp.mean(xs, axis=0, keepdims=True) + pos[0:1, :][:, None, :]


def _attn_kernel(q_ref, k_ref, v_ref, o_ref, *, scale):
    q = q_ref[...].astype(jnp.float32) * scale
    k = k_ref[...].astype(jnp.float32)
    v = v_ref[...].astype(jnp.float32)
    s = jnp.einsum("bqd,bkd->bqk", q, k, preferred_element_type=jnp.float32)
    s = s - jnp.max(s, axis=-1, keepdims=True)
    p = jnp.exp(s)
    p = p / jnp.sum(p, axis=-1, keepdims=True)       # exact softmax (parity with torch)
    o_ref[...] = jnp.einsum("bqk,bkd->bqd", p, v, preferred_element_type=jnp.float32)


# ---------------------------------------------------------------------------
# wrappers (pallas_call plumbing)
# ---------------------------------------------------------------------------
def _full_call(kernel, out_shape, *args):
    """Single-shot kernel with all operands resident in VMEM (small tensors only)."""
    return pl.pallas_call(
        kernel,
        out_shape=out_shape,
        in_specs=[pl.BlockSpec(memory_space=pltpu.MemorySpace.VMEM)] * len(args),
        out_specs=pl.BlockSpec(memory_space=pltpu.MemorySpace.VMEM),
    )(*args)


def _stats_reduce(st):
    """Reduce per-tile (T, 2, C) channel statistics to (2, C)."""
    if st.shape[0] == 1:
        return st[0]
    return _full_call(_stats_reduce_kernel,
                      jax.ShapeDtypeStruct(st.shape[1:], jnp.float32), st)


def _conv_mm(a, w, prologue=None, out_dtype=_ACT_DTYPE):
    """1x1 conv / im2col conv as y = act(A) @ W with fused per-channel (sum, sumsq)
    stats.  Full-K, weight VMEM-resident (constant index_map), grid over M only."""
    a = a.astype(jnp.bfloat16)
    w = w.astype(jnp.bfloat16)
    m_rows, k_dim = a.shape
    cout = w.shape[1]
    tm = _mtile(m_rows, 512)
    nmt = m_rows // tm

    in_specs = [pl.BlockSpec((tm, k_dim), lambda m: (m, 0)),
                pl.BlockSpec((k_dim, cout), lambda m: (0, 0))]
    args = [a, w]
    if prologue is not None:
        stats, gamma, beta, cnt = prologue
        in_specs += [pl.BlockSpec((1, k_dim), lambda m: (0, 0)),
                     pl.BlockSpec((1, k_dim), lambda m: (0, 0)),
                     pl.BlockSpec((2, k_dim), lambda m: (0, 0))]
        args += [gamma, beta, stats]
        kernel = functools.partial(_conv_mm_prologue_kernel, count_in=float(cnt))
    else:
        kernel = _conv_mm_plain_kernel

    y, st = pl.pallas_call(
        kernel,
        grid=(nmt,),
        in_specs=in_specs,
        out_specs=(pl.BlockSpec((tm, cout), lambda m: (m, 0)),
                   pl.BlockSpec((1, 2, cout), lambda m: (m, 0, 0))),
        out_shape=(jax.ShapeDtypeStruct((m_rows, cout), out_dtype),
                   jax.ShapeDtypeStruct((nmt, 2, cout), jnp.float32)),
        compiler_params=_cparams(("parallel",)),
    )(*args)
    return y, _stats_reduce(st)


def _conv3x3_s1(x_raw, w3, prologue, out_dtype=_ACT_DTYPE):
    """3x3 / stride-1 / pad-1 conv with fused BN+ReLU prologue and channel stats.
    x_raw: raw producer output (N, H, W, C); w3: (9*C, Cout)."""
    n_img, h, w, c = x_raw.shape
    cout = w3.shape[-1]
    stats, gamma, beta, cnt = prologue
    xp = jnp.pad(x_raw, ((0, 0), (1, 1), (1, 1), (0, 0)))   # spatial zero pad only
    rb = _row_block(h, w)
    nrb = h // rb

    kernel = functools.partial(_conv3x3_kernel, H=h, W=w, RB=rb, count_in=float(cnt))
    y, st = pl.pallas_call(
        kernel,
        grid=(n_img, nrb),
        in_specs=[pl.BlockSpec((None, h + 2, w + 2, c), lambda n, r: (n, 0, 0, 0)),
                  pl.BlockSpec((9 * c, cout), lambda n, r: (0, 0)),
                  pl.BlockSpec((1, c), lambda n, r: (0, 0)),
                  pl.BlockSpec((1, c), lambda n, r: (0, 0)),
                  pl.BlockSpec((2, c), lambda n, r: (0, 0))],
        out_specs=(pl.BlockSpec((None, rb, w, cout), lambda n, r: (n, r, 0, 0)),
                   pl.BlockSpec((1, 2, cout), lambda n, r: (n * nrb + r, 0, 0))),
        out_shape=(jax.ShapeDtypeStruct((n_img, h, w, cout), out_dtype),
                   jax.ShapeDtypeStruct((n_img * nrb, 2, cout), jnp.float32)),
        compiler_params=_cparams(("parallel", "parallel")),
    )(xp.astype(jnp.bfloat16), w3.astype(jnp.bfloat16), gamma, beta, stats)
    return y, _stats_reduce(st)


def _pool2(x, prologue=None, out_dtype=_ACT_DTYPE):
    """2x2 average pool (AvgPool2d(2)); with `prologue` the input is a raw conv output
    and BN + ReLU are applied before pooling, all inside one kernel.  The row pair is
    read through two dense (rows, W, C) blocks (no sublane-padded (2, C) tiles)."""
    n_img, h, w, c = x.shape
    ho, wo = h // 2, w // 2
    r_out = n_img * ho
    x4 = x.reshape(r_out, 2, w, c)          # pure metadata reshape (row pairs grouped)
    tr = _div_tile(r_out, max(8, (4 << 20) // (w * c * 4)))

    def row_spec(j):
        return pl.BlockSpec((tr, None, w, c), lambda m, _j=j: (m, _j, 0, 0))

    in_specs = [row_spec(0), row_spec(1)]
    args = [x4, x4]
    if prologue is not None:
        stats, gamma, beta, cnt = prologue
        in_specs += [pl.BlockSpec((1, c), lambda m: (0, 0)),
                     pl.BlockSpec((1, c), lambda m: (0, 0)),
                     pl.BlockSpec((2, c), lambda m: (0, 0))]
        args += [gamma, beta, stats]
        kernel = functools.partial(_pool_bn_relu_kernel, count_in=float(cnt))
    else:
        kernel = _pool_plain_kernel

    out = pl.pallas_call(
        kernel,
        grid=(r_out // tr,),
        in_specs=in_specs,
        out_specs=pl.BlockSpec((tr, wo, c), lambda m: (m, 0, 0)),
        out_shape=jax.ShapeDtypeStruct((r_out, wo, c), out_dtype),
        compiler_params=_cparams(("parallel",)),
    )(*args)
    return out.reshape(n_img, ho, wo, c)


def _bn_add_relu(y3, p3, identity):
    m_rows, c = y3.shape
    stats, gamma, beta, cnt = p3
    tm = _mtile(m_rows, 512)
    return pl.pallas_call(
        functools.partial(_bn_add_relu_kernel, count_a=float(cnt)),
        grid=(m_rows // tm,),
        in_specs=[pl.BlockSpec((tm, c), lambda m: (m, 0)),
                  pl.BlockSpec((2, c), lambda m: (0, 0)),
                  pl.BlockSpec((1, c), lambda m: (0, 0)),
                  pl.BlockSpec((1, c), lambda m: (0, 0)),
                  pl.BlockSpec((tm, c), lambda m: (m, 0))],
        out_specs=pl.BlockSpec((tm, c), lambda m: (m, 0)),
        out_shape=jax.ShapeDtypeStruct((m_rows, c), _ACT_DTYPE),
        compiler_params=_cparams(("parallel",)),
    )(y3, stats, gamma, beta, identity)


def _bn_bn_add_relu(y3, p3, yd, pd):
    m_rows, c = y3.shape
    s3, g3, b3, c3 = p3
    sd, gd, bd, cd = pd
    tm = _mtile(m_rows, 512)
    return pl.pallas_call(
        functools.partial(_bn_bn_add_relu_kernel, count_a=float(c3), count_b=float(cd)),
        grid=(m_rows // tm,),
        in_specs=[pl.BlockSpec((tm, c), lambda m: (m, 0)),
                  pl.BlockSpec((2, c), lambda m: (0, 0)),
                  pl.BlockSpec((1, c), lambda m: (0, 0)),
                  pl.BlockSpec((1, c), lambda m: (0, 0)),
                  pl.BlockSpec((tm, c), lambda m: (m, 0)),
                  pl.BlockSpec((2, c), lambda m: (0, 0)),
                  pl.BlockSpec((1, c), lambda m: (0, 0)),
                  pl.BlockSpec((1, c), lambda m: (0, 0))],
        out_specs=pl.BlockSpec((tm, c), lambda m: (m, 0)),
        out_shape=jax.ShapeDtypeStruct((m_rows, c), _ACT_DTYPE),
        compiler_params=_cparams(("parallel",)),
    )(y3, s3, g3, b3, yd, sd, gd, bd)


def _linear(a, w, bias, out_dtype=jnp.float32):
    m_rows, k_dim = a.shape
    nout = w.shape[1]
    tm = _mtile(m_rows, 512)
    return pl.pallas_call(
        _linear_kernel,
        grid=(m_rows // tm,),
        in_specs=[pl.BlockSpec((tm, k_dim), lambda m: (m, 0)),
                  pl.BlockSpec((k_dim, nout), lambda m: (0, 0)),
                  pl.BlockSpec((1, nout), lambda m: (0, 0))],
        out_specs=pl.BlockSpec((tm, nout), lambda m: (m, 0)),
        out_shape=jax.ShapeDtypeStruct((m_rows, nout), out_dtype),
        compiler_params=_cparams(("parallel",)),
    )(a.astype(jnp.bfloat16), w.astype(jnp.bfloat16),
      bias.reshape(1, nout).astype(jnp.float32))


# ---------------------------------------------------------------------------
# model pieces
# ---------------------------------------------------------------------------
def _im2col(x, k, stride, pad):
    # TODO(synk): only used for the single stride-2 stem conv (K=27); move it to a
    # tap-shift Pallas kernel as well to kill the last XLA gather/concat.
    n, h, w, c = x.shape
    xp = jnp.pad(x, ((0, 0), (pad, pad), (pad, pad), (0, 0)))
    ho = (h + 2 * pad - k) // stride + 1
    wo = (w + 2 * pad - k) // stride + 1
    cols = [xp[:, i:i + stride * ho:stride, j:j + stride * wo:stride, :]
            for i in range(k) for j in range(k)]
    return jnp.concatenate(cols, axis=-1).reshape(n * ho * wo, k * k * c)


def stem(x_img, st):
    n, h0, w0, _ = x_img.shape
    h1, w1 = h0 // 2, w0 // 2
    m1 = n * h1 * w1
    col = _im2col(x_img.astype(_ACT_DTYPE), 3, 2, 1)             # (M1, 27)
    y1, s1 = _conv_mm(col, st["w1"])
    y2, s2 = _conv3x3_s1(y1.reshape(n, h1, w1, y1.shape[-1]), st["w2"],
                         prologue=(s1, st["g1"], st["b1"], m1))
    y3, s3 = _conv3x3_s1(y2, st["w3"], prologue=(s2, st["g2"], st["b2"], m1))
    return _pool2(y3, prologue=(s3, st["g3"], st["b3"], m1))     # finished activation


def bottleneck(x_act, blk):
    n, h, w, cin = x_act.shape
    stride = blk["stride"]
    m = n * h * w

    # conv1 (1x1) -> raw y1 + stats
    y1, s1 = _conv_mm(x_act.reshape(m, cin), blk["w1"])
    # conv2 (3x3, stride 1) with bn1+relu prologue
    y2, s2 = _conv3x3_s1(y1.reshape(n, h, w, y1.shape[-1]), blk["w2"],
                         prologue=(s1, blk["g1"], blk["b1"], m))

    if stride > 1:
        act2 = _pool2(y2, prologue=(s2, blk["g2"], blk["b2"], m))     # bn2+relu+pool
        ho, wo = h // stride, w // stride
        mo = n * ho * wo
        y3, s3 = _conv_mm(act2.reshape(mo, act2.shape[-1]), blk["w3"])
    else:
        ho, wo, mo = h, w, m
        y3, s3 = _conv_mm(y2.reshape(m, y2.shape[-1]), blk["w3"],
                          prologue=(s2, blk["g2"], blk["b2"], m))
    c4 = y3.shape[-1]

    if blk["has_ds"]:
        xd = _pool2(x_act) if stride > 1 else x_act
        yd, sd = _conv_mm(xd.reshape(mo, cin), blk["wd"])
        out = _bn_bn_add_relu(y3, (s3, blk["g3"], blk["b3"], mo),
                              yd, (sd, blk["gd"], blk["bd"], mo))
    else:
        out = _bn_add_relu(y3, (s3, blk["g3"], blk["b3"], mo),
                           x_act.reshape(mo, c4))
    return out.reshape(n, ho, wo, c4)


def attn_pool(x4, p, heads):
    n, h, w, _ = x4.shape
    c = p["embed"]
    x4 = x4[..., :c].astype(jnp.float32)
    l = h * w
    xs = jnp.transpose(x4.reshape(n, l, c), (1, 0, 2))                 # (L, N, C)
    x_in = _full_call(_mean_pos_kernel,
                      jax.ShapeDtypeStruct((l + 1, n, c), jnp.float32),
                      xs, p["pos"])

    q = _linear(x_in[0], p["wq"], p["bq"])                             # (N, C)
    kv = _linear(x_in.reshape((l + 1) * n, c), p["wkv"], p["bkv"])     # fused K|V
    kv = kv.reshape(l + 1, n, 2 * c)
    k, v = kv[..., :c], kv[..., c:]

    dh = c // heads
    qh = q.reshape(n * heads, 1, dh)
    kh = jnp.transpose(k.reshape(l + 1, n, heads, dh), (1, 2, 0, 3)).reshape(n * heads, l + 1, dh)
    vh = jnp.transpose(v.reshape(l + 1, n, heads, dh), (1, 2, 0, 3)).reshape(n * heads, l + 1, dh)

    o = _full_call(functools.partial(_attn_kernel, scale=1.0 / math.sqrt(dh)),
                   jax.ShapeDtypeStruct((n * heads, 1, dh), jnp.float32),
                   qh, kh, vh)
    return _linear(o.reshape(n, c), p["wc"], p["bc"])                  # (N, output_dim)


def modified_resnet_forward(x_nchw, params, heads):
    x_img = jnp.transpose(x_nchw.astype(jnp.float32), (0, 2, 3, 1))    # NCHW -> NHWC

    x = stem(x_img, params["stem"])
    for blk in params["layer1"]:
        x = bottleneck(x, blk)
    x2 = x
    for blk in params["layer2"]:
        x2 = bottleneck(x2, blk)
    x3 = x2
    for blk in params["layer3"]:
        x3 = bottleneck(x3, blk)
    x4 = x3
    for blk in params["layer4"]:
        x4 = bottleneck(x4, blk)

    x5 = attn_pool(x4, params["attnpool"], heads)

    c1, c2, c3 = params["c_true"]
    to_nchw = lambda t, c: jnp.transpose(t[..., :c], (0, 3, 1, 2)).astype(jnp.float32)
    return x5, (to_nchw(x, c1), to_nchw(x2, c2), to_nchw(x3, c3))


# ---------------------------------------------------------------------------
# deterministic parameter init (synthetic; lane-padded to 128 with zero padding
# so the padded channels stay exactly zero throughout the network)
# ---------------------------------------------------------------------------
class _KeyGen:
    def __init__(self, seed):
        self._key = jax.random.PRNGKey(seed)

    def __call__(self):
        self._key, sub = jax.random.split(self._key)
        return sub


def init_params(layers, output_dim, heads, input_resolution, width, seed=0):
    kg = _KeyGen(seed)
    wh = width // 2

    def conv1x1_w(cin, cout):
        w = jax.random.normal(kg(), (cin, cout), jnp.float32) / math.sqrt(cin)
        wp = jnp.zeros((_cpad(cin), _cpad(cout)), jnp.float32).at[:cin, :cout].set(w)
        return wp.astype(jnp.bfloat16)

    def conv3x3_w(cin, cout):
        w = jax.random.normal(kg(), (3, 3, cin, cout), jnp.float32) / math.sqrt(9 * cin)
        wp = jnp.zeros((3, 3, _cpad(cin), _cpad(cout)), jnp.float32)
        wp = wp.at[:, :, :cin, :cout].set(w)
        return wp.reshape(9 * _cpad(cin), _cpad(cout)).astype(jnp.bfloat16)

    def stem1_w(cout):     # (27, cout_pad); image channels (3) stay unpadded
        w = jax.random.normal(kg(), (27, cout), jnp.float32) / math.sqrt(27)
        wp = jnp.zeros((27, _cpad(cout)), jnp.float32).at[:, :cout].set(w)
        return wp.astype(jnp.bfloat16)

    def bn(c):
        g = 1.0 + 0.1 * jax.random.normal(kg(), (c,), jnp.float32)
        b = 0.1 * jax.random.normal(kg(), (c,), jnp.float32)
        cp = _cpad(c)
        gp = jnp.zeros((1, cp), jnp.float32).at[0, :c].set(g)
        bp = jnp.zeros((1, cp), jnp.float32).at[0, :c].set(b)
        return gp, bp

    g1, b1 = bn(wh)
    g2, b2 = bn(wh)
    g3, b3 = bn(width)
    params = {"stem": {"w1": stem1_w(wh), "g1": g1, "b1": b1,
                       "w2": conv3x3_w(wh, wh), "g2": g2, "b2": b2,
                       "w3": conv3x3_w(wh, width), "g3": g3, "b3": b3}}

    inplanes = width
    layer_cfg = [(width, layers[0], 1), (width * 2, layers[1], 2),
                 (width * 4, layers[2], 2), (width * 8, layers[3], 2)]
    for li, (planes, nblocks, stride) in enumerate(layer_cfg):
        blocks = []
        for bidx in range(nblocks):
            st = stride if bidx == 0 else 1
            has_ds = (st > 1) or (inplanes != planes * 4)
            bg1, bb1 = bn(planes)
            bg2, bb2 = bn(planes)
            bg3, bb3 = bn(planes * 4)
            blk = {"stride": st, "has_ds": has_ds,
                   "w1": conv1x1_w(inplanes, planes), "g1": bg1, "b1": bb1,
                   "w2": conv3x3_w(planes, planes), "g2": bg2, "b2": bb2,
                   "w3": conv1x1_w(planes, planes * 4), "g3": bg3, "b3": bb3}
            if has_ds:
                gd, bd = bn(planes * 4)
                blk["wd"] = conv1x1_w(inplanes, planes * 4)
                blk["gd"], blk["bd"] = gd, bd
            blocks.append(blk)
            inplanes = planes * 4
        params[f"layer{li + 1}"] = blocks

    embed = width * 32
    sp = input_resolution // 32

    def lin(cin, cout):
        w = jax.random.normal(kg(), (cin, cout), jnp.float32) / math.sqrt(cin)
        b = 0.1 * jax.random.normal(kg(), (cout,), jnp.float32)
        return w, b

    wq, bq = lin(embed, embed)
    wk, bk = lin(embed, embed)
    wv, bv = lin(embed, embed)
    wc, bc = lin(embed, output_dim)
    params["attnpool"] = {
        "pos": jax.random.normal(kg(), (sp * sp + 1, embed), jnp.float32) / embed ** 0.5,
        "wq": wq, "bq": bq,
        "wkv": jnp.concatenate([wk, wv], axis=1),
        "bkv": jnp.concatenate([bk, bv]),
        "wc": wc, "bc": bc,
        "embed": embed}
    params["c_true"] = (width * 4, width * 8, width * 16)
    return params


# ---------------------------------------------------------------------------
# demo
# ---------------------------------------------------------------------------
if __name__ == "__main__":
    # Small config consistent with ModifiedResNet: layers=(1,1,1,1), width=8,
    # input_resolution=32 (-> spacial_dim 1 after /32), embed_dim=256, heads=4.
    LAYERS = (1, 1, 1, 1)
    OUTPUT_DIM = 32
    HEADS = 4
    INPUT_RES = 32
    WIDTH = 8
    BATCH = 2

    params = init_params(LAYERS, OUTPUT_DIM, HEADS, INPUT_RES, WIDTH, seed=0)
    x = jax.random.normal(jax.random.PRNGKey(0),
                          (BATCH, 3, INPUT_RES, INPUT_RES), jnp.float32)

    x5, (c1, c2, c3) = modified_resnet_forward(x, params, HEADS)
    jax.block_until_ready((x5, c1, c2, c3))

    assert x5.shape == (BATCH, OUTPUT_DIM)
    assert c1.shape == (BATCH, WIDTH * 4, INPUT_RES // 4, INPUT_RES // 4)
    assert c2.shape == (BATCH, WIDTH * 8, INPUT_RES // 8, INPUT_RES // 8)
    assert c3.shape == (BATCH, WIDTH * 16, INPUT_RES // 16, INPUT_RES // 16)
    print("KERNEL_OK")
</pallas_src>

<mosaic_0001>
module attributes {stable_mosaic.version = 11 : i64} {
  func.func @_conv_mm_plain_kernel(%arg0: i32, %arg1: memref<512x27xbf16, #tpu.memory_space<vmem>>, %arg2: memref<27x128xbf16, #tpu.memory_space<vmem>>, %arg3: memref<512x128xbf16, #tpu.memory_space<vmem>>, %arg4: memref<1x2x128xf32, #tpu.memory_space<vmem>>) attributes {dimension_semantics = [#tpu.dimension_semantics<parallel>], iteration_bounds = array<i64: 1>, scalar_prefetch = 0 : i64, scratch_operands = 0 : i64, tpu.core_type = #tpu.core_type<tc>, window_params = [{transform_indices = @transform_0, window_bounds = array<i64: 512, 27>}, {pipeline_mode = #tpu.pipeline_mode<synchronous>, transform_indices = @transform_1, window_bounds = array<i64: 27, 128>}, {transform_indices = @transform_2, window_bounds = array<i64: 512, 128>}, {transform_indices = @transform_3, window_bounds = array<i64: 1, 2, 128>}]} {
    %c0 = arith.constant 0 : index
    %c0_0 = arith.constant 0 : index
    %0 = vector.load %arg1[%c0, %c0_0] : memref<512x27xbf16, #tpu.memory_space<vmem>>, vector<512x27xbf16>
    %c0_1 = arith.constant 0 : index
    %c0_2 = arith.constant 0 : index
    %1 = vector.load %arg2[%c0_1, %c0_2] : memref<27x128xbf16, #tpu.memory_space<vmem>>, vector<27x128xbf16>
    %cst = arith.constant dense<0.000000e+00> : vector<512x128xf32>
    %2 = tpu.matmul %0, %1, %cst {dimension_numbers = #tpu.dot_dimension_numbers<[1], [0], [0], [1], [0, 0, 1, 1], [], []>} : vector<512x27xbf16>, vector<27x128xbf16>, vector<512x128xf32> -> vector<512x128xf32>
    %3 = arith.truncf %2 : vector<512x128xf32> to vector<512x128xbf16>
    %c0_3 = arith.constant 0 : index
    %c0_4 = arith.constant 0 : index
    %4 = vector.load %arg3[%c0_3, %c0_4] : memref<512x128xbf16, #tpu.memory_space<vmem>>, vector<512x128xbf16>
    tpu.vector_store %arg3[%c0_3, %c0_4], %3 {strides = array<i32>} : memref<512x128xbf16, #tpu.memory_space<vmem>>, vector<512x128xbf16>,
    %cst_5 = arith.constant dense<0.000000e+00> : vector<128xf32>
    %5 = vector.multi_reduction <add>, %2, %cst_5 [0] : vector<512x128xf32> to vector<128xf32>
    %6 = vector.shape_cast %5 : vector<128xf32> to vector<1x128xf32>
    %c0_6 = arith.constant 0 : index
    %c0_7 = arith.constant 0 : index
    %c0_8 = arith.constant 0 : index
    %7 = vector.load %arg4[%c0_6, %c0_7, %c0_8] : memref<1x2x128xf32, #tpu.memory_space<vmem>>, vector<1x1x128xf32>
    %8 = vector.shape_cast %7 : vector<1x1x128xf32> to vector<1x128xf32>
    %9 = vector.shape_cast %6 : vector<1x128xf32> to vector<1x1x128xf32>
    tpu.vector_store %arg4[%c0_6, %c0_7, %c0_8], %9 {strides = array<i32>} : memref<1x2x128xf32, #tpu.memory_space<vmem>>, vector<1x1x128xf32>,
    %10 = arith.mulf %2, %2 : vector<512x128xf32>
    %cst_9 = arith.constant dense<0.000000e+00> : vector<128xf32>
    %11 = vector.multi_reduction <add>, %10, %cst_9 [0] : vector<512x128xf32> to vector<128xf32>
    %12 = vector.shape_cast %11 : vector<128xf32> to vector<1x128xf32>
    %c0_10 = arith.constant 0 : index
    %c1 = arith.constant 1 : index
    %c0_11 = arith.constant 0 : index
    %13 = vector.load %arg4[%c0_10, %c1, %c0_11] : memref<1x2x128xf32, #tpu.memory_space<vmem>>, vector<1x1x128xf32>
    %14 = vector.shape_cast %13 : vector<1x1x128xf32> to vector<1x128xf32>
    %15 = vector.shape_cast %12 : vector<1x128xf32> to vector<1x1x128xf32>
    tpu.vector_store %arg4[%c0_10, %c1, %c0_11], %15 {strides = array<i32>} : memref<1x2x128xf32, #tpu.memory_space<vmem>>, vector<1x1x128xf32>,
    return
  }
  func.func @transform_0(%arg0: i32) -> (i32, i32) {
    %c0_i32 = arith.constant 0 : i32
    %c0_i32_0 = arith.constant 0 : i32
    return %arg0, %c0_i32 : i32, i32
  }
  func.func @transform_1(%arg0: i32) -> (i32, i32) {
    %c0_i32 = arith.constant 0 : i32
    %c0_i32_0 = arith.constant 0 : i32
    %c0_i32_1 = arith.constant 0 : i32
    return %c0_i32, %c0_i32_0 : i32, i32
  }
  func.func @transform_2(%arg0: i32) -> (i32, i32) {
    %c0_i32 = arith.constant 0 : i32
    %c0_i32_0 = arith.constant 0 : i32
    return %arg0, %c0_i32 : i32, i32
  }
  func.func @transform_3(%arg0: i32) -> (i32, i32, i32) {
    %c0_i32 = arith.constant 0 : i32
    %c0_i32_0 = arith.constant 0 : i32
    %c0_i32_1 = arith.constant 0 : i32
    return %arg0, %c0_i32, %c0_i32_0 : i32, i32, i32
  }
}

</mosaic_0001>

<llo_original>
// kernel: tpu_custom_call.1
$region0: #{tpu_custom_call.1}
  #allocation0 [shape = 'u32[]', space=smem, size = 0x4, offset = 0x4, fixed_abs, tag = 'smem constant byte address 0x4 - core index']
  #allocation1 [shape = 'u32[144,128]{1,0:T(1,128)}', space=vmem, size = 0x12000, scoped, tag = 'internal scratch']
  %s0 = inlined_call_operand.vmem [shape: bf16[512,27], index: 0, kind: input, shape index: {}]
  %s1 = inlined_call_operand.vmem [shape: bf16[27,128], index: 1, kind: input, shape index: {}]
  %s2 = inlined_call_operand.hbm [shape: bf16[512,128], index: 2, kind: output, shape index: {0}]
  %s3 = inlined_call_operand.hbm [shape: f32[1,2,128], index: 3, kind: output, shape index: {1}]
  %4 = xla_tuple %s2, %s3
  %s5 = sld [smem:[#allocation0]]
  $region26: #{tpu_custom_call.1} parent=0
    _
  %s7 = ssub.s32 1, %s5
  %s8 = scalar_select 0, %s7, %s5
  $region1: #{tpu_custom_call.1} parent=0
    #allocation2 [shape = 'u8[131072]{0}', space=vmem, size = 0x20000, scoped, tag = 'output window, operand 0, single buffered']
    #allocation3 [shape = 's32[1]{0}', space=sflag, size = 0x4, scoped, tag = 'scoped memory for tpu_custom_call.1']
    #allocation4 [shape = 'u8[1024]{0}', space=vmem, size = 0x400, scoped, tag = 'output window, operand 1, single buffered']
    #allocation5 [shape = 's32[1]{0}', space=sflag, size = 0x4, scoped, tag = 'scoped memory for tpu_custom_call.1']
    %9 = vsyncpa [#allocation3], 0
    %10 = vsyncpa [#allocation5], 0
    // Predicated region
    $region2: #{tpu_custom_call.1} parent=1 // pred_check
      _
    $region3: #{tpu_custom_call.1} parent=1 // pred_check_branch
      %12 = sbr.rel (0) target = $region5
    $region4: #{tpu_custom_call.1} parent=1 // pred_region
      _
    $region5: #{tpu_custom_call.1} parent=1 // pred_fallthru
      _
    // Predicated region
    $region6: #{tpu_custom_call.1} parent=1 // pred_check
      _
    $region7: #{tpu_custom_call.1} parent=1 // pred_check_branch
      %14 = sbr.rel (0) target = $region9
    $region8: #{tpu_custom_call.1} parent=1 // pred_region
      _
    $region9: #{tpu_custom_call.1} parent=1 // pred_fallthru
      _
    %v16 = vld [vmem:[%s0] sm:$0xf]
    %v17 = vld [vmem:[%s0 + $0x4] sm:$0xf]
    %v18 = vld [vmem:[%s0 + $0x8] sm:$0xf]
    %v19 = vld [vmem:[%s0 + $0xc] sm:$0xf]
    %v20 = vld [vmem:[%s0 + $0x10] sm:$0xf]
    %v21 = vld [vmem:[%s0 + $0x14] sm:$0xf]
    %v22 = vld [vmem:[%s0 + $0x18] sm:$0xf]
    %v23 = vld [vmem:[%s0 + $0x1c] sm:$0xf]
    %v24 = vld [vmem:[%s0 + $0x20] sm:$0xf]
    %v25 = vld [vmem:[%s0 + $0x24] sm:$0xf]
    %v26 = vld [vmem:[%s0 + $0x28] sm:$0xf]
    %v27 = vld [vmem:[%s0 + $0x2c] sm:$0xf]
    %v28 = vld [vmem:[%s0 + $0x30] sm:$0xf]
    %v29 = vld [vmem:[%s0 + $0x34] sm:$0xf]
    %v30 = vld [vmem:[%s0 + $0x38] sm:$0xf]
    %v31 = vld [vmem:[%s0 + $0x3c] sm:$0xf]
    %v32 = vld [vmem:[%s0 + $0x40] sm:$0xf]
    %v33 = vld [vmem:[%s0 + $0x44] sm:$0xf]
    %v34 = vld [vmem:[%s0 + $0x48] sm:$0xf]
    %v35 = vld [vmem:[%s0 + $0x4c] sm:$0xf]
    %v36 = vld [vmem:[%s0 + $0x50] sm:$0xf]
    %v37 = vld [vmem:[%s0 + $0x54] sm:$0xf]
    %v38 = vld [vmem:[%s0 + $0x58] sm:$0xf]
    %v39 = vld [vmem:[%s0 + $0x5c] sm:$0xf]
    %v40 = vld [vmem:[%s0 + $0x60] sm:$0xf]
    %v41 = vld [vmem:[%s0 + $0x64] sm:$0xf]
    %v42 = vld [vmem:[%s0 + $0x68] sm:$0xf]
    %v43 = vld [vmem:[%s0 + $0x6c] sm:$0xf]
    %v44 = vld [vmem:[%s0 + $0x70] sm:$0xf]
    %v45 = vld [vmem:[%s0 + $0x74] sm:$0xf]
    %v46 = vld [vmem:[%s0 + $0x78] sm:$0xf]
    %v47 = vld [vmem:[%s0 + $0x7c] sm:$0xf]
    %v48 = vld [vmem:[%s0 + $0x80] sm:$0xf]
    %v49 = vld [vmem:[%s0 + $0x84] sm:$0xf]
    %v50 = vld [vmem:[%s0 + $0x88] sm:$0xf]
    %v51 = vld [vmem:[%s0 + $0x8c] sm:$0xf]
    %v52 = vld [vmem:[%s0 + $0x90] sm:$0xf]
    %v53 = vld [vmem:[%s0 + $0x94] sm:$0xf]
    %v54 = vld [vmem:[%s0 + $0x98] sm:$0xf]
    %v55 = vld [vmem:[%s0 + $0x9c] sm:$0xf]
    %v56 = vld [vmem:[%s0 + $0xa0] sm:$0xf]
    %v57 = vld [vmem:[%s0 + $0xa4] sm:$0xf]
    %v58 = vld [vmem:[%s0 + $0xa8] sm:$0xf]
    %v59 = vld [vmem:[%s0 + $0xac] sm:$0xf]
    %v60 = vld [vmem:[%s0 + $0xb0] sm:$0xf]
    %v61 = vld [vmem:[%s0 + $0xb4] sm:$0xf]
    %v62 = vld [vmem:[%s0 + $0xb8] sm:$0xf]
    %v63 = vld [vmem:[%s0 + $0xbc] sm:$0xf]
    %v64 = vld [vmem:[%s0 + $0xc0] sm:$0xf]
    %v65 = vld [vmem:[%s0 + $0xc4] sm:$0xf]
    %v66 = vld [vmem:[%s0 + $0xc8] sm:$0xf]
    %v67 = vld [vmem:[%s0 + $0xcc] sm:$0xf]
    %v68 = vld [vmem:[%s0 + $0xd0] sm:$0xf]
    %v69 = vld [vmem:[%s0 + $0xd4] sm:$0xf]
    %v70 = vld [vmem:[%s0 + $0xd8] sm:$0xf]
    %v71 = vld [vmem:[%s0 + $0xdc] sm:$0xf]
    %v72 = vld [vmem:[%s0 + $0xe0] sm:$0xf]
    %v73 = vld [vmem:[%s0 + $0xe4] sm:$0xf]
    %v74 = vld [vmem:[%s0 + $0xe8] sm:$0xf]
    %v75 = vld [vmem:[%s0 + $0xec] sm:$0xf]
    %v76 = vld [vmem:[%s0 + $0xf0] sm:$0xf]
    %v77 = vld [vmem:[%s0 + $0xf4] sm:$0xf]
    %v78 = vld [vmem:[%s0 + $0xf8] sm:$0xf]
    %v79 = vld [vmem:[%s0 + $0xfc] sm:$0xf]
    %v80 = vld [vmem:[%s1] sm:$0xf]
    %v81 = vld [vmem:[%s1 + $0x4] sm:$0xf]
    %v82 = vld [vmem:[%s1 + $0x8] sm:$0xf]
    %v83 = vld [vmem:[%s1 + $0xc] sm:$0x3]
    %v148 = vunpack.c.l.b16 %v16
    %v149 = vunpack.c.l.b16 %v17
    %v150 = vunpack.c.l.b16 %v18
    %v151 = vunpack.c.l.b16 %v19
    %v152 = vunpack.c.l.b16 %v20
    %v153 = vunpack.c.l.b16 %v21
    %v154 = vunpack.c.l.b16 %v22
    %v155 = vunpack.c.l.b16 %v23
    %v156 = vunpack.c.l.b16 %v24
    %v157 = vunpack.c.l.b16 %v25
    %v158 = vunpack.c.l.b16 %v26
    %v159 = vunpack.c.l.b16 %v27
    %v160 = vunpack.c.l.b16 %v28
    %v161 = vunpack.c.l.b16 %v29
    %v162 = vunpack.c.l.b16 %v30
    %v163 = vunpack.c.l.b16 %v31
    %v164 = vunpack.c.l.b16 %v32
    %v165 = vunpack.c.l.b16 %v33
    %v166 = vunpack.c.l.b16 %v34
    %v167 = vunpack.c.l.b16 %v35
    %v168 = vunpack.c.l.b16 %v36
    %v169 = vunpack.c.l.b16 %v37
    %v170 = vunpack.c.l.b16 %v38
    %v171 = vunpack.c.l.b16 %v39
    %v172 = vunpack.c.l.b16 %v40
    %v173 = vunpack.c.l.b16 %v41
    %v174 = vunpack.c.l.b16 %v42
    %v175 = vunpack.c.l.b16 %v43
    %v176 = vunpack.c.l.b16 %v44
    %v177 = vunpack.c.l.b16 %v45
    %v178 = vunpack.c.l.b16 %v46
    %v179 = vunpack.c.l.b16 %v47
    %v180 = vunpack.c.l.b16 %v48
    %v181 = vunpack.c.l.b16 %v49
    %v182 = vunpack.c.l.b16 %v50
    %v183 = vunpack.c.l.b16 %v51
    %v184 = vunpack.c.l.b16 %v52
    %v185 = vunpack.c.l.b16 %v53
    %v186 = vunpack.c.l.b16 %v54
    %v187 = vunpack.c.l.b16 %v55
    %v188 = vunpack.c.l.b16 %v56
    %v189 = vunpack.c.l.b16 %v57
    %v190 = vunpack.c.l.b16 %v58
    %v191 = vunpack.c.l.b16 %v59
    %v192 = vunpack.c.l.b16 %v60
    %v193 = vunpack.c.l.b16 %v61
    %v194 = vunpack.c.l.b16 %v62
    %v195 = vunpack.c.l.b16 %v63
    %v196 = vunpack.c.l.b16 %v64
    %v197 = vunpack.c.l.b16 %v65
    %v198 = vunpack.c.l.b16 %v66
    %v199 = vunpack.c.l.b16 %v67
    %v200 = vunpack.c.l.b16 %v68
    %v201 = vunpack.c.l.b16 %v69
    %v202 = vunpack.c.l.b16 %v70
    %v203 = vunpack.c.l.b16 %v71
    %v204 = vunpack.c.l.b16 %v72
    %v205 = vunpack.c.l.b16 %v73
    %v206 = vunpack.c.l.b16 %v74
    %v207 = vunpack.c.l.b16 %v75
    %v208 = vunpack.c.l.b16 %v76
    %v209 = vunpack.c.l.b16 %v77
    %v210 = vunpack.c.l.b16 %v78
    %v211 = vunpack.c.l.b16 %v79
    %v212 = vpack.c.b16 %v149, %v148
    %v213 = vpack.c.b16 %v151, %v150
    %v214 = vpack.c.b16 %v153, %v152
    %v215 = vpack.c.b16 %v155, %v154
    %v216 = vpack.c.b16 %v157, %v156
    %v217 = vpack.c.b16 %v159, %v158
    %v218 = vpack.c.b16 %v161, %v160
    %v219 = vpack.c.b16 %v163, %v162
    %v220 = vpack.c.b16 %v165, %v164
    %v221 = vpack.c.b16 %v167, %v166
    %v222 = vpack.c.b16 %v169, %v168
    %v223 = vpack.c.b16 %v171, %v170
    %v224 = vpack.c.b16 %v173, %v172
    %v225 = vpack.c.b16 %v175, %v174
    %v226 = vpack.c.b16 %v177, %v176
    %v227 = vpack.c.b16 %v179, %v178
    %v228 = vpack.c.b16 %v181, %v180
    %v229 = vpack.c.b16 %v183, %v182
    %v230 = vpack.c.b16 %v185, %v184
    %v231 = vpack.c.b16 %v187, %v186
    %v232 = vpack.c.b16 %v189, %v188
    %v233 = vpack.c.b16 %v191, %v190
    %v234 = vpack.c.b16 %v193, %v192
    %v235 = vpack.c.b16 %v195, %v194
    %v236 = vpack.c.b16 %v197, %v196
    %v237 = vpack.c.b16 %v199, %v198
    %v238 = vpack.c.b16 %v201, %v200
    %v239 = vpack.c.b16 %v203, %v202
    %v240 = vpack.c.b16 %v205, %v204
    %v241 = vpack.c.b16 %v207, %v206
    %v242 = vpack.c.b16 %v209, %v208
    %v243 = vpack.c.b16 %v211, %v210
    %v248 = vunpack.c.l.b16 %v80
    %v249 = vunpack.c.l.b16 %v81
    %v250 = vunpack.c.l.b16 %v82
    %v251 = vunpack.c.l.b16 %v83
    %v252 = vpack.c.b16 %v249, %v248
    %v253 = vpack.c.b16 %v251, %v250
    %vm255 = vcmask 220160
    %v257 = vsel %vm255, %v212, 0
    %v260 = vsel %vm255, %v213, 0
    %v263 = vsel %vm255, %v214, 0
    %v266 = vsel %vm255, %v215, 0
    %v269 = vsel %vm255, %v216, 0
    %v272 = vsel %vm255, %v217, 0
    %v275 = vsel %vm255, %v218, 0
    %v278 = vsel %vm255, %v219, 0
    %v281 = vsel %vm255, %v220, 0
    %v284 = vsel %vm255, %v221, 0
    %v287 = vsel %vm255, %v222, 0
    %v290 = vsel %vm255, %v223, 0
    %v293 = vsel %vm255, %v224, 0
    %v296 = vsel %vm255, %v225, 0
    %v299 = vsel %vm255, %v226, 0
    %v302 = vsel %vm255, %v227, 0
    %v305 = vsel %vm255, %v228, 0
    %v308 = vsel %vm255, %v229, 0
    %v311 = vsel %vm255, %v230, 0
    %v314 = vsel %vm255, %v231, 0
    %v317 = vsel %vm255, %v232, 0
    %v320 = vsel %vm255, %v233, 0
    %v323 = vsel %vm255, %v234, 0
    %v326 = vsel %vm255, %v235, 0
    %v329 = vsel %vm255, %v236, 0
    %v332 = vsel %vm255, %v237, 0
    %v335 = vsel %vm255, %v238, 0
    %v338 = vsel %vm255, %v239, 0
    %v341 = vsel %vm255, %v240, 0
    %v344 = vsel %vm255, %v241, 0
    %v347 = vsel %vm255, %v242, 0
    %v350 = vsel %vm255, %v243, 0
    %vm352 = vcmask 1044480
    %vm353 = vcmask 1045504
    %v354 = vsel %vm352, 4294967295, 65535
    %v355 = vsel %vm353, %v354, 0
    %v357 = vand.u32 %v253, %v355
    %359 = vmatprep.subr.bf16.mxu0 0
    %360 = vmatpush1.bf16.msra.mxu0 %v252
    %361 = vmatprep.subr.bf16.mxu0 0
    %362 = vmatpush1.bf16.msra.mxu0 %v357
    %363 = vmatprep.subr.bf16.mxu0 0
    %364 = vmatpush1.bf16.msra.mxu0 0
    %365 = vmatprep.subr.bf16.mxu0 0
    %366 = vmatpush1.bf16.msra.mxu0 0
    %367 = vmatprep.subr.bf16.mxu0 0
    %368 = vmatpush1.bf16.msra.mxu0 0
    %369 = vmatprep.subr.bf16.mxu0 0
    %370 = vmatpush1.bf16.msra.mxu0 0
    %371 = vmatprep.subr.bf16.mxu0 0
    %372 = vmatpush1.bf16.msra.mxu0 0
    %373 = vmatprep.subr.bf16.mxu0 0
    %374 = vmatpush1.bf16.msra.mxu0 0
    %375 = vmatprep.subr.bf16.mxu0 0
    %376 = vmatpush1.bf16.msra.mxu0 0
    %377 = vmatprep.subr.bf16.mxu0 0
    %378 = vmatpush1.bf16.msra.mxu0 0
    %379 = vmatprep.subr.bf16.mxu0 0
    %380 = vmatpush1.bf16.msra.mxu0 0
    %381 = vmatprep.subr.bf16.mxu0 0
    %382 = vmatpush1.bf16.msra.mxu0 0
    %383 = vmatprep.subr.bf16.mxu0 0
    %384 = vmatpush1.bf16.msra.mxu0 0
    %385 = vmatprep.subr.bf16.mxu0 0
    %386 = vmatpush1.bf16.msra.mxu0 0
    %387 = vmatprep.subr.bf16.mxu0 0
    %388 = vmatpush1.bf16.msra.mxu0 0
    %389 = vmatprep.subr.bf16.mxu0 0
    %390 = vmatpush1.bf16.msra.mxu0 0
    %391 = vmatprep.mubr.bf16.mxu0 0
    %392 = vmatmul.mubr.bf16.gmra.mrb[0].mxu0 %v257
    %v393 = vpop.f32.mrb[0].mxu0
    %v394 = vadd.f32 0.0, %v393
    %v395 = vpop.f32.mrb[0].mxu0
    %v396 = vpop.f32.mrb[0].mxu0
    %v397 = vadd.f32 0.0, %v396
    %v398 = vpop.f32.mrb[0].mxu0
    %399 = vmatprep.mubr.bf16.mxu0 0
    %400 = vmatmul.mubr.bf16.gmra.mrb[0].mxu0 %v260
    %v401 = vpop.f32.mrb[0].mxu0
    %v402 = vadd.f32 0.0, %v401
    %v403 = vpop.f32.mrb[0].mxu0
    %v404 = vpop.f32.mrb[0].mxu0
    %v405 = vadd.f32 0.0, %v404
    %v406 = vpop.f32.mrb[0].mxu0
    %407 = vmatprep.mubr.bf16.mxu0 0
    %408 = vmatmul.mubr.bf16.gmra.mrb[0].mxu0 %v263
    %v409 = vpop.f32.mrb[0].mxu0
    %v410 = vadd.f32 0.0, %v409
    %v411 = vpop.f32.mrb[0].mxu0
    %v412 = vpop.f32.mrb[0].mxu0
    %v413 = vadd.f32 0.0, %v412
    %v414 = vpop.f32.mrb[0].mxu0
    %415 = vmatprep.mubr.bf16.mxu0 0
    %416 = vmatmul.mubr.bf16.gmra.mrb[0].mxu0 %v266
    %v417 = vpop.f32.mrb[0].mxu0
    %v418 = vadd.f32 0.0, %v417
    %v419 = vpop.f32.mrb[0].mxu0
    %v420 = vpop.f32.mrb[0].mxu0
    %v421 = vadd.f32 0.0, %v420
    %v422 = vpop.f32.mrb[0].mxu0
    %423 = vmatprep.mubr.bf16.mxu0 0
    %424 = vmatmul.mubr.bf16.gmra.mrb[0].mxu0 %v269
    %v425 = vpop.f32.mrb[0].mxu0
    %v426 = vadd.f32 0.0, %v425
    %v427 = vpop.f32.mrb[0].mxu0
    %v428 = vpop.f32.mrb[0].mxu0
    %v429 = vadd.f32 0.0, %v428
    %v430 = vpop.f32.mrb[0].mxu0
    %431 = vmatprep.mubr.bf16.mxu0 0
    %432 = vmatmul.mubr.bf16.gmra.mrb[0].mxu0 %v272
    %v433 = vpop.f32.mrb[0].mxu0
    %v434 = vadd.f32 0.0, %v433
    %v435 = vpop.f32.mrb[0].mxu0
    %v436 = vpop.f32.mrb[0].mxu0
    %v437 = vadd.f32 0.0, %v436
    %v438 = vpop.f32.mrb[0].mxu0
    %439 = vmatprep.mubr.bf16.mxu0 0
    %440 = vmatmul.mubr.bf16.gmra.mrb[0].mxu0 %v275
    %v441 = vpop.f32.mrb[0].mxu0
    %v442 = vadd.f32 0.0, %v441
    %v443 = vpop.f32.mrb[0].mxu0
    %v444 = vpop.f32.mrb[0].mxu0
    %v445 = vadd.f32 0.0, %v444
    %v446 = vpop.f32.mrb[0].mxu0
    %447 = vmatprep.mubr.bf16.mxu0 0
    %448 = vmatmul.mubr.bf16.gmra.mrb[0].mxu0 %v278
    %v449 = vpop.f32.mrb[0].mxu0
    %v450 = vadd.f32 0.0, %v449
    %v451 = vpop.f32.mrb[0].mxu0
    %v452 = vpop.f32.mrb[0].mxu0
    %v453 = vadd.f32 0.0, %v452
    %v454 = vpop.f32.mrb[0].mxu0
    %455 = vmatprep.mubr.bf16.mxu0 0
    %456 = vmatmul.mubr.bf16.gmra.mrb[0].mxu0 %v281
    %v457 = vpop.f32.mrb[0].mxu0
    %v458 = vadd.f32 0.0, %v457
    %v459 = vpop.f32.mrb[0].mxu0
    %v460 = vpop.f32.mrb[0].mxu0
    %v461 = vadd.f32 0.0, %v460
    %v462 = vpop.f32.mrb[0].mxu0
    %463 = vmatprep.mubr.bf16.mxu0 0
    %464 = vmatmul.mubr.bf16.gmra.mrb[0].mxu0 %v284
    %v465 = vpop.f32.mrb[0].mxu0
    %v466 = vadd.f32 0.0, %v465
    %v467 = vpop.f32.mrb[0].mxu0
    %v468 = vpop.f32.mrb[0].mxu0
    %v469 = vadd.f32 0.0, %v468
    %v470 = vpop.f32.mrb[0].mxu0
    %471 = vmatprep.mubr.bf16.mxu0 0
    %472 = vmatmul.mubr.bf16.gmra.mrb[0].mxu0 %v287
    %v473 = vpop.f32.mrb[0].mxu0
    %v474 = vadd.f32 0.0, %v473
    %v475 = vpop.f32.mrb[0].mxu0
    %v476 = vpop.f32.mrb[0].mxu0
    %v477 = vadd.f32 0.0, %v476
    %v478 = vpop.f32.mrb[0].mxu0
    %479 = vmatprep.mubr.bf16.mxu0 0
    %480 = vmatmul.mubr.bf16.gmra.mrb[0].mxu0 %v290
    %v481 = vpop.f32.mrb[0].mxu0
    %v482 = vadd.f32 0.0, %v481
    %v483 = vpop.f32.mrb[0].mxu0
    %v484 = vpop.f32.mrb[0].mxu0
    %v485 = vadd.f32 0.0, %v484
    %v486 = vpop.f32.mrb[0].mxu0
    %487 = vmatprep.mubr.bf16.mxu0 0
    %488 = vmatmul.mubr.bf16.gmra.mrb[0].mxu0 %v293
    %v489 = vpop.f32.mrb[0].mxu0
    %v490 = vadd.f32 0.0, %v489
    %v491 = vpop.f32.mrb[0].mxu0
    %v492 = vpop.f32.mrb[0].mxu0
    %v493 = vadd.f32 0.0, %v492
    %v494 = vpop.f32.mrb[0].mxu0
    %495 = vmatprep.mubr.bf16.mxu0 0
    %496 = vmatmul.mubr.bf16.gmra.mrb[0].mxu0 %v296
    %v497 = vpop.f32.mrb[0].mxu0
    %v498 = vadd.f32 0.0, %v497
    %v499 = vpop.f32.mrb[0].mxu0
    %v500 = vpop.f32.mrb[0].mxu0
    %v501 = vadd.f32 0.0, %v500
    %v502 = vpop.f32.mrb[0].mxu0
    %503 = vmatprep.mubr.bf16.mxu0 0
    %504 = vmatmul.mubr.bf16.gmra.mrb[0].mxu0 %v299
    %v505 = vpop.f32.mrb[0].mxu0
    %v506 = vadd.f32 0.0, %v505
    %v507 = vpop.f32.mrb[0].mxu0
    %v508 = vpop.f32.mrb[0].mxu0
    %v509 = vadd.f32 0.0, %v508
    %v510 = vpop.f32.mrb[0].mxu0
    %511 = vmatprep.mubr.bf16.mxu0 0
    %512 = vmatmul.mubr.bf16.gmra.mrb[0].mxu0 %v302
    %v513 = vpop.f32.mrb[0].mxu0
    %v514 = vadd.f32 0.0, %v513
    %v515 = vpop.f32.mrb[0].mxu0
    %v516 = vpop.f32.mrb[0].mxu0
    %v517 = vadd.f32 0.0, %v516
    %v518 = vpop.f32.mrb[0].mxu0
    %519 = vmatprep.mubr.bf16.mxu0 0
    %520 = vmatmul.mubr.bf16.gmra.mrb[0].mxu0 %v305
    %v521 = vpop.f32.mrb[0].mxu0
    %v522 = vadd.f32 0.0, %v521
    %v523 = vpop.f32.mrb[0].mxu0
    %v524 = vpop.f32.mrb[0].mxu0
    %v525 = vadd.f32 0.0, %v524
    %v526 = vpop.f32.mrb[0].mxu0
    %527 = vmatprep.mubr.bf16.mxu0 0
    %528 = vmatmul.mubr.bf16.gmra.mrb[0].mxu0 %v308
    %v529 = vpop.f32.mrb[0].mxu0
    %v530 = vadd.f32 0.0, %v529
    %v531 = vpop.f32.mrb[0].mxu0
    %v532 = vpop.f32.mrb[0].mxu0
    %v533 = vadd.f32 0.0, %v532
    %v534 = vpop.f32.mrb[0].mxu0
    %535 = vmatprep.mubr.bf16.mxu0 0
    %536 = vmatmul.mubr.bf16.gmra.mrb[0].mxu0 %v311
    %v537 = vpop.f32.mrb[0].mxu0
    %v538 = vadd.f32 0.0, %v537
    %v539 = vpop.f32.mrb[0].mxu0
    %v540 = vpop.f32.mrb[0].mxu0
    %v541 = vadd.f32 0.0, %v540
    %v542 = vpop.f32.mrb[0].mxu0
    %543 = vmatprep.mubr.bf16.mxu0 0
    %544 = vmatmul.mubr.bf16.gmra.mrb[0].mxu0 %v314
    %v545 = vpop.f32.mrb[0].mxu0
    %v546 = vadd.f32 0.0, %v545
    %v547 = vpop.f32.mrb[0].mxu0
    %v548 = vpop.f32.mrb[0].mxu0
    %v549 = vadd.f32 0.0, %v548
    %v550 = vpop.f32.mrb[0].mxu0
    %551 = vmatprep.mubr.bf16.mxu0 0
    %552 = vmatmul.mubr.bf16.gmra.mrb[0].mxu0 %v317
    %v553 = vpop.f32.mrb[0].mxu0
    %v554 = vadd.f32 0.0, %v553
    %v555 = vpop.f32.mrb[0].mxu0
    %v556 = vpop.f32.mrb[0].mxu0
    %v557 = vadd.f32 0.0, %v556
    %v558 = vpop.f32.mrb[0].mxu0
    %559 = vmatprep.mubr.bf16.mxu0 0
    %560 = vmatmul.mubr.bf16.gmra.mrb[0].mxu0 %v320
    %v561 = vpop.f32.mrb[0].mxu0
    %v562 = vadd.f32 0.0, %v561
    %v563 = vpop.f32.mrb[0].mxu0
    %v564 = vpop.f32.mrb[0].mxu0
    %v565 = vadd.f32 0.0, %v564
    %v566 = vpop.f32.mrb[0].mxu0
    %567 = vmatprep.mubr.bf16.mxu0 0
    %568 = vmatmul.mubr.bf16.gmra.mrb[0].mxu0 %v323
    %v569 = vpop.f32.mrb[0].mxu0
    %v570 = vadd.f32 0.0, %v569
    %v571 = vpop.f32.mrb[0].mxu0
    %v572 = vpop.f32.mrb[0].mxu0
    %v573 = vadd.f32 0.0, %v572
    %v574 = vpop.f32.mrb[0].mxu0
    %575 = vmatprep.mubr.bf16.mxu0 0
    %576 = vmatmul.mubr.bf16.gmra.mrb[0].mxu0 %v326
    %v577 = vpop.f32.mrb[0].mxu0
    %v578 = vadd.f32 0.0, %v577
    %v579 = vpop.f32.mrb[0].mxu0
    %v580 = vpop.f32.mrb[0].mxu0
    %v581 = vadd.f32 0.0, %v580
    %v582 = vpop.f32.mrb[0].mxu0
    %583 = vmatprep.mubr.bf16.mxu0 0
    %584 = vmatmul.mubr.bf16.gmra.mrb[0].mxu0 %v329
    %v585 = vpop.f32.mrb[0].mxu0
    %v586 = vadd.f32 0.0, %v585
    %v587 = vpop.f32.mrb[0].mxu0
    %v588 = vpop.f32.mrb[0].mxu0
    %v589 = vadd.f32 0.0, %v588
    %v590 = vpop.f32.mrb[0].mxu0
    %591 = vmatprep.mubr.bf16.mxu0 0
    %592 = vmatmul.mubr.bf16.gmra.mrb[0].mxu0 %v332
    %v593 = vpop.f32.mrb[0].mxu0
    %v594 = vadd.f32 0.0, %v593
    %v595 = vpop.f32.mrb[0].mxu0
    %v596 = vpop.f32.mrb[0].mxu0
    %v597 = vadd.f32 0.0, %v596
    %v598 = vpop.f32.mrb[0].mxu0
    %599 = vmatprep.mubr.bf16.mxu0 0
    %600 = vmatmul.mubr.bf16.gmra.mrb[0].mxu0 %v335
    %v601 = vpop.f32.mrb[0].mxu0
    %v602 = vadd.f32 0.0, %v601
    %v603 = vpop.f32.mrb[0].mxu0
    %v604 = vpop.f32.mrb[0].mxu0
    %v605 = vadd.f32 0.0, %v604
    %v606 = vpop.f32.mrb[0].mxu0
    %607 = vmatprep.mubr.bf16.mxu0 0
    %608 = vmatmul.mubr.bf16.gmra.mrb[0].mxu0 %v338
    %v609 = vpop.f32.mrb[0].mxu0
    %v610 = vadd.f32 0.0, %v609
    %v611 = vpop.f32.mrb[0].mxu0
    %v612 = vpop.f32.mrb[0].mxu0
    %v613 = vadd.f32 0.0, %v612
    %v614 = vpop.f32.mrb[0].mxu0
    %615 = vmatprep.mubr.bf16.mxu0 0
    %616 = vmatmul.mubr.bf16.gmra.mrb[0].mxu0 %v341
    %v617 = vpop.f32.mrb[0].mxu0
    %v618 = vadd.f32 0.0, %v617
    %v619 = vpop.f32.mrb[0].mxu0
    %v620 = vpop.f32.mrb[0].mxu0
    %v621 = vadd.f32 0.0, %v620
    %v622 = vpop.f32.mrb[0].mxu0
    %623 = vmatprep.mubr.bf16.mxu0 0
    %624 = vmatmul.mubr.bf16.gmra.mrb[0].mxu0 %v344
    %v625 = vpop.f32.mrb[0].mxu0
    %v626 = vadd.f32 0.0, %v625
    %v627 = vpop.f32.mrb[0].mxu0
    %v628 = vpop.f32.mrb[0].mxu0
    %v629 = vadd.f32 0.0, %v628
    %v630 = vpop.f32.mrb[0].mxu0
    %631 = vmatprep.mubr.bf16.mxu0 0
    %632 = vmatmul.mubr.bf16.gmra.mrb[0].mxu0 %v347
    %v633 = vpop.f32.mrb[0].mxu0
    %v634 = vadd.f32 0.0, %v633
    %v635 = vpop.f32.mrb[0].mxu0
    %v636 = vpop.f32.mrb[0].mxu0
    %v637 = vadd.f32 0.0, %v636
    %v638 = vpop.f32.mrb[0].mxu0
    %639 = vmatprep.mubr.bf16.mxu0 0
    %640 = vmatmul.mubr.bf16.gmra.mrb[0].mxu0 %v350
    %v641 = vpop.f32.mrb[0].mxu0
    %v642 = vadd.f32 0.0, %v641
    %v643 = vpop.f32.mrb[0].mxu0
    %v644 = vpop.f32.mrb[0].mxu0
    %v645 = vadd.f32 0.0, %v644
    %v646 = vpop.f32.mrb[0].mxu0
    %647 = vdwg.mxu0
    %v648 = vpack.c.bf16 %v397, %v394
    %v649 = vpack.c.bf16 %v405, %v402
    %v650 = vpack.c.bf16 %v413, %v410
    %v651 = vpack.c.bf16 %v421, %v418
    %v652 = vpack.c.bf16 %v429, %v426
    %v653 = vpack.c.bf16 %v437, %v434
    %v654 = vpack.c.bf16 %v445, %v442
    %v655 = vpack.c.bf16 %v453, %v450
    %v656 = vpack.c.bf16 %v461, %v458
    %v657 = vpack.c.bf16 %v469, %v466
    %v658 = vpack.c.bf16 %v477, %v474
    %v659 = vpack.c.bf16 %v485, %v482
    %v660 = vpack.c.bf16 %v493, %v490
    %v661 = vpack.c.bf16 %v501, %v498
    %v662 = vpack.c.bf16 %v509, %v506
    %v663 = vpack.c.bf16 %v517, %v514
    %v664 = vpack.c.bf16 %v525, %v522
    %v665 = vpack.c.bf16 %v533, %v530
    %v666 = vpack.c.bf16 %v541, %v538
    %v667 = vpack.c.bf16 %v549, %v546
    %v668 = vpack.c.bf16 %v557, %v554
    %v669 = vpack.c.bf16 %v565, %v562
    %v670 = vpack.c.bf16 %v573, %v570
    %v671 = vpack.c.bf16 %v581, %v578
    %v672 = vpack.c.bf16 %v589, %v586
    %v673 = vpack.c.bf16 %v597, %v594
    %v674 = vpack.c.bf16 %v605, %v602
    %v675 = vpack.c.bf16 %v613, %v610
    %v676 = vpack.c.bf16 %v621, %v618
    %v677 = vpack.c.bf16 %v629, %v626
    %v678 = vpack.c.bf16 %v637, %v634
    %v679 = vpack.c.bf16 %v645, %v642
    %v712 = vunpack.c.l.b16 %v648
    %v713 = vunpack.c.h.b16 %v648
    %v714 = vunpack.c.l.b16 %v649
    %v715 = vunpack.c.h.b16 %v649
    %v716 = vunpack.c.l.b16 %v650
    %v717 = vunpack.c.h.b16 %v650
    %v718 = vunpack.c.l.b16 %v651
    %v719 = vunpack.c.h.b16 %v651
    %v720 = vunpack.c.l.b16 %v652
    %v721 = vunpack.c.h.b16 %v652
    %v722 = vunpack.c.l.b16 %v653
    %v723 = vunpack.c.h.b16 %v653
    %v724 = vunpack.c.l.b16 %v654
    %v725 = vunpack.c.h.b16 %v654
    %v726 = vunpack.c.l.b16 %v655
    %v727 = vunpack.c.h.b16 %v655
    %v728 = vunpack.c.l.b16 %v656
    %v729 = vunpack.c.h.b16 %v656
    %v730 = vunpack.c.l.b16 %v657
    %v731 = vunpack.c.h.b16 %v657
    %v732 = vunpack.c.l.b16 %v658
    %v733 = vunpack.c.h.b16 %v658
    %v734 = vunpack.c.l.b16 %v659
    %v735 = vunpack.c.h.b16 %v659
    %v736 = vunpack.c.l.b16 %v660
    %v737 = vunpack.c.h.b16 %v660
    %v738 = vunpack.c.l.b16 %v661
    %v739 = vunpack.c.h.b16 %v661
    %v740 = vunpack.c.l.b16 %v662
    %v741 = vunpack.c.h.b16 %v662
    %v742 = vunpack.c.l.b16 %v663
    %v743 = vunpack.c.h.b16 %v663
    %v744 = vunpack.c.l.b16 %v664
    %v745 = vunpack.c.h.b16 %v664
    %v746 = vunpack.c.l.b16 %v665
    %v747 = vunpack.c.h.b16 %v665
    %v748 = vunpack.c.l.b16 %v666
    %v749 = vunpack.c.h.b16 %v666
    %v750 = vunpack.c.l.b16 %v667
    %v751 = vunpack.c.h.b16 %v667
    %v752 = vunpack.c.l.b16 %v668
    %v753 = vunpack.c.h.b16 %v668
    %v754 = vunpack.c.l.b16 %v669
    %v755 = vunpack.c.h.b16 %v669
    %v756 = vunpack.c.l.b16 %v670
    %v757 = vunpack.c.h.b16 %v670
    %v758 = vunpack.c.l.b16 %v671
    %v759 = vunpack.c.h.b16 %v671
    %v760 = vunpack.c.l.b16 %v672
    %v761 = vunpack.c.h.b16 %v672
    %v762 = vunpack.c.l.b16 %v673
    %v763 = vunpack.c.h.b16 %v673
    %v764 = vunpack.c.l.b16 %v674
    %v765 = vunpack.c.h.b16 %v674
    %v766 = vunpack.c.l.b16 %v675
    %v767 = vunpack.c.h.b16 %v675
    %v768 = vunpack.c.l.b16 %v676
    %v769 = vunpack.c.h.b16 %v676
    %v770 = vunpack.c.l.b16 %v677
    %v771 = vunpack.c.h.b16 %v677
    %v772 = vunpack.c.l.b16 %v678
    %v773 = vunpack.c.h.b16 %v678
    %v774 = vunpack.c.l.b16 %v679
    %v775 = vunpack.c.h.b16 %v679
    %v776 = vpack.c.b16 %v712, %v712
    %v777 = vpack.c.b16 %v713, %v713
    %v778 = vpack.c.b16 %v714, %v714
    %v779 = vpack.c.b16 %v715, %v715
    %v780 = vpack.c.b16 %v716, %v716
    %v781 = vpack.c.b16 %v717, %v717
    %v782 = vpack.c.b16 %v718, %v718
    %v783 = vpack.c.b16 %v719, %v719
    %v784 = vpack.c.b16 %v720, %v720
    %v785 = vpack.c.b16 %v721, %v721
    %v786 = vpack.c.b16 %v722, %v722
    %v787 = vpack.c.b16 %v723, %v723
    %v788 = vpack.c.b16 %v724, %v724
    %v789 = vpack.c.b16 %v725, %v725
    %v790 = vpack.c.b16 %v726, %v726
    %v791 = vpack.c.b16 %v727, %v727
    %v792 = vpack.c.b16 %v728, %v728
    %v793 = vpack.c.b16 %v729, %v729
    %v794 = vpack.c.b16 %v730, %v730
    %v795 = vpack.c.b16 %v731, %v731
    %v796 = vpack.c.b16 %v732, %v732
    %v797 = vpack.c.b16 %v733, %v733
    %v798 = vpack.c.b16 %v734, %v734
    %v799 = vpack.c.b16 %v735, %v735
    %v800 = vpack.c.b16 %v736, %v736
    %v801 = vpack.c.b16 %v737, %v737
    %v802 = vpack.c.b16 %v738, %v738
    %v803 = vpack.c.b16 %v739, %v739
    %v804 = vpack.c.b16 %v740, %v740
    %v805 = vpack.c.b16 %v741, %v741
    %v806 = vpack.c.b16 %v742, %v742
    %v807 = vpack.c.b16 %v743, %v743
    %v808 = vpack.c.b16 %v744, %v744
    %v809 = vpack.c.b16 %v745, %v745
    %v810 = vpack.c.b16 %v746, %v746
    %v811 = vpack.c.b16 %v747, %v747
    %v812 = vpack.c.b16 %v748, %v748
    %v813 = vpack.c.b16 %v749, %v749
    %v814 = vpack.c.b16 %v750, %v750
    %v815 = vpack.c.b16 %v751, %v751
    %v816 = vpack.c.b16 %v752, %v752
    %v817 = vpack.c.b16 %v753, %v753
    %v818 = vpack.c.b16 %v754, %v754
    %v819 = vpack.c.b16 %v755, %v755
    %v820 = vpack.c.b16 %v756, %v756
    %v821 = vpack.c.b16 %v757, %v757
    %v822 = vpack.c.b16 %v758, %v758
    %v823 = vpack.c.b16 %v759, %v759
    %v824 = vpack.c.b16 %v760, %v760
    %v825 = vpack.c.b16 %v761, %v761
    %v826 = vpack.c.b16 %v762, %v762
    %v827 = vpack.c.b16 %v763, %v763
    %v828 = vpack.c.b16 %v764, %v764
    %v829 = vpack.c.b16 %v765, %v765
    %v830 = vpack.c.b16 %v766, %v766
    %v831 = vpack.c.b16 %v767, %v767
    %v832 = vpack.c.b16 %v768, %v768
    %v833 = vpack.c.b16 %v769, %v769
    %v834 = vpack.c.b16 %v770, %v770
    %v835 = vpack.c.b16 %v771, %v771
    %v836 = vpack.c.b16 %v772, %v772
    %v837 = vpack.c.b16 %v773, %v773
    %v838 = vpack.c.b16 %v774, %v774
    %v839 = vpack.c.b16 %v775, %v775
    %904 = vst [vmem:[#allocation2] sm:$0xf] %v776
    %905 = vst [vmem:[#allocation2 + $0x4] sm:$0xf] %v777
    %906 = vst [vmem:[#allocation2 + $0x8] sm:$0xf] %v778
    %907 = vst [vmem:[#allocation2 + $0xc] sm:$0xf] %v779
    %908 = vst [vmem:[#allocation2 + $0x10] sm:$0xf] %v780
    %909 = vst [vmem:[#allocation2 + $0x14] sm:$0xf] %v781
    %910 = vst [vmem:[#allocation2 + $0x18] sm:$0xf] %v782
    %911 = vst [vmem:[#allocation2 + $0x1c] sm:$0xf] %v783
    %912 = vst [vmem:[#allocation2 + $0x20] sm:$0xf] %v784
    %913 = vst [vmem:[#allocation2 + $0x24] sm:$0xf] %v785
    %914 = vst [vmem:[#allocation2 + $0x28] sm:$0xf] %v786
    %915 = vst [vmem:[#allocation2 + $0x2c] sm:$0xf] %v787
    %916 = vst [vmem:[#allocation2 + $0x30] sm:$0xf] %v788
    %917 = vst [vmem:[#allocation2 + $0x34] sm:$0xf] %v789
    %918 = vst [vmem:[#allocation2 + $0x38] sm:$0xf] %v790
    %919 = vst [vmem:[#allocation2 + $0x3c] sm:$0xf] %v791
    %920 = vst [vmem:[#allocation2 + $0x40] sm:$0xf] %v792
    %921 = vst [vmem:[#allocation2 + $0x44] sm:$0xf] %v793
    %922 = vst [vmem:[#allocation2 + $0x48] sm:$0xf] %v794
    %923 = vst [vmem:[#allocation2 + $0x4c] sm:$0xf] %v795
    %924 = vst [vmem:[#allocation2 + $0x50] sm:$0xf] %v796
    %925 = vst [vmem:[#allocation2 + $0x54] sm:$0xf] %v797
    %926 = vst [vmem:[#allocation2 + $0x58] sm:$0xf] %v798
    %927 = vst [vmem:[#allocation2 + $0x5c] sm:$0xf] %v799
    %928 = vst [vmem:[#allocation2 + $0x60] sm:$0xf] %v800
    %929 = vst [vmem:[#allocation2 + $0x64] sm:$0xf] %v801
    %930 = vst [vmem:[#allocation2 + $0x68] sm:$0xf] %v802
    %931 = vst [vmem:[#allocation2 + $0x6c] sm:$0xf] %v803
    %932 = vst [vmem:[#allocation2 + $0x70] sm:$0xf] %v804
    %933 = vst [vmem:[#allocation2 + $0x74] sm:$0xf] %v805
    %934 = vst [vmem:[#allocation2 + $0x78] sm:$0xf] %v806
    %935 = vst [vmem:[#allocation2 + $0x7c] sm:$0xf] %v807
    %936 = vst [vmem:[#allocation2 + $0x80] sm:$0xf] %v808
    %937 = vst [vmem:[#allocation2 + $0x84] sm:$0xf] %v809
    %938 = vst [vmem:[#allocation2 + $0x88] sm:$0xf] %v810
    %939 = vst [vmem:[#allocation2 + $0x8c] sm:$0xf] %v811
    %940 = vst [vmem:[#allocation2 + $0x90] sm:$0xf] %v812
    %941 = vst [vmem:[#allocation2 + $0x94] sm:$0xf] %v813
    %942 = vst [vmem:[#allocation2 + $0x98] sm:$0xf] %v814
    %943 = vst [vmem:[#allocation2 + $0x9c] sm:$0xf] %v815
    %944 = vst [vmem:[#allocation2 + $0xa0] sm:$0xf] %v816
    %945 = vst [vmem:[#allocation2 + $0xa4] sm:$0xf] %v817
    %946 = vst [vmem:[#allocation2 + $0xa8] sm:$0xf] %v818
    %947 = vst [vmem:[#allocation2 + $0xac] sm:$0xf] %v819
    %948 = vst [vmem:[#allocation2 + $0xb0] sm:$0xf] %v820
    %949 = vst [vmem:[#allocation2 + $0xb4] sm:$0xf] %v821
    %950 = vst [vmem:[#allocation2 + $0xb8] sm:$0xf] %v822
    %951 = vst [vmem:[#allocation2 + $0xbc] sm:$0xf] %v823
    %952 = vst [vmem:[#allocation2 + $0xc0] sm:$0xf] %v824
    %953 = vst [vmem:[#allocation2 + $0xc4] sm:$0xf] %v825
    %954 = vst [vmem:[#allocation2 + $0xc8] sm:$0xf] %v826
    %955 = vst [vmem:[#allocation2 + $0xcc] sm:$0xf] %v827
    %956 = vst [vmem:[#allocation2 + $0xd0] sm:$0xf] %v828
    %957 = vst [vmem:[#allocation2 + $0xd4] sm:$0xf] %v829
    %958 = vst [vmem:[#allocation2 + $0xd8] sm:$0xf] %v830
    %959 = vst [vmem:[#allocation2 + $0xdc] sm:$0xf] %v831
    %960 = vst [vmem:[#allocation2 + $0xe0] sm:$0xf] %v832
    %961 = vst [vmem:[#allocation2 + $0xe4] sm:$0xf] %v833
    %962 = vst [vmem:[#allocation2 + $0xe8] sm:$0xf] %v834
    %963 = vst [vmem:[#allocation2 + $0xec] sm:$0xf] %v835
    %964 = vst [vmem:[#allocation2 + $0xf0] sm:$0xf] %v836
    %965 = vst [vmem:[#allocation2 + $0xf4] sm:$0xf] %v837
    %966 = vst [vmem:[#allocation2 + $0xf8] sm:$0xf] %v838
    %967 = vst [vmem:[#allocation2 + $0xfc] sm:$0xf] %v839
    %v968 = vadd.f32 %v394, %v397
    %v969 = vadd.f32 %v968, %v402
    %v970 = vadd.f32 %v969, %v405
    %v971 = vadd.f32 %v970, %v410
    %v972 = vadd.f32 %v971, %v413
    %v973 = vadd.f32 %v972, %v418
    %v974 = vadd.f32 %v973, %v421
    %v975 = vadd.f32 %v974, %v426
    %v976 = vadd.f32 %v975, %v429
    %v977 = vadd.f32 %v976, %v434
    %v978 = vadd.f32 %v977, %v437
    %v979 = vadd.f32 %v978, %v442
    %v980 = vadd.f32 %v979, %v445
    %v981 = vadd.f32 %v980, %v450
    %v982 = vadd.f32 %v981, %v453
    %v983 = vadd.f32 %v982, %v458
    %v984 = vadd.f32 %v983, %v461
    %v985 = vadd.f32 %v984, %v466
    %v986 = vadd.f32 %v985, %v469
    %v987 = vadd.f32 %v986, %v474
    %v988 = vadd.f32 %v987, %v477
    %v989 = vadd.f32 %v988, %v482
    %v990 = vadd.f32 %v989, %v485
    %v991 = vadd.f32 %v990, %v490
    %v992 = vadd.f32 %v991, %v493
    %v993 = vadd.f32 %v992, %v498
    %v994 = vadd.f32 %v993, %v501
    %v995 = vadd.f32 %v994, %v506
    %v996 = vadd.f32 %v995, %v509
    %v997 = vadd.f32 %v996, %v514
    %v998 = vadd.f32 %v997, %v517
    %v999 = vadd.f32 %v998, %v522
    %v1000 = vadd.f32 %v999, %v525
    %v1001 = vadd.f32 %v1000, %v530
    %v1002 = vadd.f32 %v1001, %v533
    %v1003 = vadd.f32 %v1002, %v538
    %v1004 = vadd.f32 %v1003, %v541
    %v1005 = vadd.f32 %v1004, %v546
    %v1006 = vadd.f32 %v1005, %v549
    %v1007 = vadd.f32 %v1006, %v554
    %v1008 = vadd.f32 %v1007, %v557
    %v1009 = vadd.f32 %v1008, %v562
    %v1010 = vadd.f32 %v1009, %v565
    %v1011 = vadd.f32 %v1010, %v570
    %v1012 = vadd.f32 %v1011, %v573
    %v1013 = vadd.f32 %v1012, %v578
    %v1014 = vadd.f32 %v1013, %v581
    %v1015 = vadd.f32 %v1014, %v586
    %v1016 = vadd.f32 %v1015, %v589
    %v1017 = vadd.f32 %v1016, %v594
    %v1018 = vadd.f32 %v1017, %v597
    %v1019 = vadd.f32 %v1018, %v602
    %v1020 = vadd.f32 %v1019, %v605
    %v1021 = vadd.f32 %v1020, %v610
    %v1022 = vadd.f32 %v1021, %v613
    %v1023 = vadd.f32 %v1022, %v618
    %v1024 = vadd.f32 %v1023, %v621
    %v1025 = vadd.f32 %v1024, %v626
    %v1026 = vadd.f32 %v1025, %v629
    %v1027 = vadd.f32 %v1026, %v634
    %v1028 = vadd.f32 %v1027, %v637
    %v1029 = vadd.f32 %v1028, %v642
    %v1030 = vadd.f32 %v1029, %v645
    %v1031 = vrot.slane %v1030, 4
    %v1032 = vadd.f32 %v1030, %v1031
    %v1033 = vrot.slane %v1032, 2
    %v1034 = vadd.f32 %v1032, %v1033
    %v1035 = vrot.slane %v1034, 1
    %v1036 = vadd.f32 %v1034, %v1035
    %1037 = vst [vmem:[#allocation4] sm:$0x1] %v1036
    %v1038 = vmul.f32 %v394, %v394
    %v1039 = vmul.f32 %v397, %v397
    %v1040 = vmul.f32 %v402, %v402
    %v1041 = vmul.f32 %v405, %v405
    %v1042 = vmul.f32 %v410, %v410
    %v1043 = vmul.f32 %v413, %v413
    %v1044 = vmul.f32 %v418, %v418
    %v1045 = vmul.f32 %v421, %v421
    %v1046 = vmul.f32 %v426, %v426
    %v1047 = vmul.f32 %v429, %v429
    %v1048 = vmul.f32 %v434, %v434
    %v1049 = vmul.f32 %v437, %v437
    %v1050 = vmul.f32 %v442, %v442
    %v1051 = vmul.f32 %v445, %v445
    %v1052 = vmul.f32 %v450, %v450
    %v1053 = vmul.f32 %v453, %v453
    %v1054 = vmul.f32 %v458, %v458
    %v1055 = vmul.f32 %v461, %v461
    %v1056 = vmul.f32 %v466, %v466
    %v1057 = vmul.f32 %v469, %v469
    %v1058 = vmul.f32 %v474, %v474
    %v1059 = vmul.f32 %v477, %v477
    %v1060 = vmul.f32 %v482, %v482
    %v1061 = vmul.f32 %v485, %v485
    %v1062 = vmul.f32 %v490, %v490
    %v1063 = vmul.f32 %v493, %v493
    %v1064 = vmul.f32 %v498, %v498
    %v1065 = vmul.f32 %v501, %v501
    %v1066 = vmul.f32 %v506, %v506
    %v1067 = vmul.f32 %v509, %v509
    %v1068 = vmul.f32 %v514, %v514
    %v1069 = vmul.f32 %v517, %v517
    %v1070 = vmul.f32 %v522, %v522
    %v1071 = vmul.f32 %v525, %v525
    %v1072 = vmul.f32 %v530, %v530
    %v1073 = vmul.f32 %v533, %v533
    %v1074 = vmul.f32 %v538, %v538
    %v1075 = vmul.f32 %v541, %v541
    %v1076 = vmul.f32 %v546, %v546
    %v1077 = vmul.f32 %v549, %v549
    %v1078 = vmul.f32 %v554, %v554
    %v1079 = vmul.f32 %v557, %v557
    %v1080 = vmul.f32 %v562, %v562
    %v1081 = vmul.f32 %v565, %v565
    %v1082 = vmul.f32 %v570, %v570
    %v1083 = vmul.f32 %v573, %v573
    %v1084 = vmul.f32 %v578, %v578
    %v1085 = vmul.f32 %v581, %v581
    %v1086 = vmul.f32 %v586, %v586
    %v1087 = vmul.f32 %v589, %v589
    %v1088 = vmul.f32 %v594, %v594
    %v1089 = vmul.f32 %v597, %v597
    %v1090 = vmul.f32 %v602, %v602
    %v1091 = vmul.f32 %v605, %v605
    %v1092 = vmul.f32 %v610, %v610
    %v1093 = vmul.f32 %v613, %v613
    %v1094 = vmul.f32 %v618, %v618
    %v1095 = vmul.f32 %v621, %v621
    %v1096 = vmul.f32 %v626, %v626
    %v1097 = vmul.f32 %v629, %v629
    %v1098 = vmul.f32 %v634, %v634
    %v1099 = vmul.f32 %v637, %v637
    %v1100 = vmul.f32 %v642, %v642
    %v1101 = vmul.f32 %v645, %v645
    %v1102 = vadd.f32 %v1038, %v1039
    %v1103 = vadd.f32 %v1102, %v1040
    %v1104 = vadd.f32 %v1103, %v1041
    %v1105 = vadd.f32 %v1104, %v1042
    %v1106 = vadd.f32 %v1105, %v1043
    %v1107 = vadd.f32 %v1106, %v1044
    %v1108 = vadd.f32 %v1107, %v1045
    %v1109 = vadd.f32 %v1108, %v1046
    %v1110 = vadd.f32 %v1109, %v1047
    %v1111 = vadd.f32 %v1110, %v1048
    %v1112 = vadd.f32 %v1111, %v1049
    %v1113 = vadd.f32 %v1112, %v1050
    %v1114 = vadd.f32 %v1113, %v1051
    %v1115 = vadd.f32 %v1114, %v1052
    %v1116 = vadd.f32 %v1115, %v1053
    %v1117 = vadd.f32 %v1116, %v1054
    %v1118 = vadd.f32 %v1117, %v1055
    %v1119 = vadd.f32 %v1118, %v1056
    %v1120 = vadd.f32 %v1119, %v1057
    %v1121 = vadd.f32 %v1120, %v1058
    %v1122 = vadd.f32 %v1121, %v1059
    %v1123 = vadd.f32 %v1122, %v1060
    %v1124 = vadd.f32 %v1123, %v1061
    %v1125 = vadd.f32 %v1124, %v1062
    %v1126 = vadd.f32 %v1125, %v1063
    %v1127 = vadd.f32 %v1126, %v1064
    %v1128 = vadd.f32 %v1127, %v1065
    %v1129 = vadd.f32 %v1128, %v1066
    %v1130 = vadd.f32 %v1129, %v1067
    %v1131 = vadd.f32 %v1130, %v1068
    %v1132 = vadd.f32 %v1131, %v1069
    %v1133 = vadd.f32 %v1132, %v1070
    %v1134 = vadd.f32 %v1133, %v1071
    %v1135 = vadd.f32 %v1134, %v1072
    %v1136 = vadd.f32 %v1135, %v1073
    %v1137 = vadd.f32 %v1136, %v1074
    %v1138 = vadd.f32 %v1137, %v1075
    %v1139 = vadd.f32 %v1138, %v1076
    %v1140 = vadd.f32 %v1139, %v1077
    %v1141 = vadd.f32 %v1140, %v1078
    %v1142 = vadd.f32 %v1141, %v1079
    %v1143 = vadd.f32 %v1142, %v1080
    %v1144 = vadd.f32 %v1143, %v1081
    %v1145 = vadd.f32 %v1144, %v1082
    %v1146 = vadd.f32 %v1145, %v1083
    %v1147 = vadd.f32 %v1146, %v1084
    %v1148 = vadd.f32 %v1147, %v1085
    %v1149 = vadd.f32 %v1148, %v1086
    %v1150 = vadd.f32 %v1149, %v1087
    %v1151 = vadd.f32 %v1150, %v1088
    %v1152 = vadd.f32 %v1151, %v1089
    %v1153 = vadd.f32 %v1152, %v1090
    %v1154 = vadd.f32 %v1153, %v1091
    %v1155 = vadd.f32 %v1154, %v1092
    %v1156 = vadd.f32 %v1155, %v1093
    %v1157 = vadd.f32 %v1156, %v1094
    %v1158 = vadd.f32 %v1157, %v1095
    %v1159 = vadd.f32 %v1158, %v1096
    %v1160 = vadd.f32 %v1159, %v1097
    %v1161 = vadd.f32 %v1160, %v1098
    %v1162 = vadd.f32 %v1161, %v1099
    %v1163 = vadd.f32 %v1162, %v1100
    %v1164 = vadd.f32 %v1163, %v1101
    %v1165 = vrot.slane %v1164, 4
    %v1166 = vadd.f32 %v1164, %v1165
    %v1167 = vrot.slane %v1166, 2
    %v1168 = vadd.f32 %v1166, %v1167
    %v1169 = vrot.slane %v1168, 1
    %v1170 = vadd.f32 %v1168, %v1169
    %1171 = vst [vmem:[#allocation4 + $0x1] sm:$0x1] %v1170
    // Predicated region
    $region10: #{tpu_custom_call.1} parent=1 // pred_check
      _
    $region11: #{tpu_custom_call.1} parent=1 // pred_check_branch
      %1173 = sbr.rel (0) target = $region13
    $region12: #{tpu_custom_call.1} parent=1 // pred_region
      %s1175 = ssub.s32 4096, 4096
      %1176 = vsyncadd [#allocation3], %s1175
      %s1177 = sshll.u32 [#allocation2], 4
      %s1178 = int_to_ptr.vmem [resolvable:$true] %s1177
      %1183 = dma.vmem_to_hbm [thread:$0]  %s1178, 4096, %s2, [#allocation3], 64, 64, 4
    $region13: #{tpu_custom_call.1} parent=1 // pred_fallthru
      _
    // Predicated region
    $region14: #{tpu_custom_call.1} parent=1 // pred_check
      _
    $region15: #{tpu_custom_call.1} parent=1 // pred_check_branch
      %1185 = sbr.rel (0) target = $region17
    $region16: #{tpu_custom_call.1} parent=1 // pred_region
      %s1187 = ssub.s32 32, 32
      %1188 = vsyncadd [#allocation5], %s1187
      %s1190 = sshll.u32 [#allocation4], 4
      %s1191 = int_to_ptr.vmem [resolvable:$true] %s1190
      %1193 = dma.vmem_to_hbm [thread:$0]  %s1191, 32, %s3, [#allocation5]
    $region17: #{tpu_custom_call.1} parent=1 // pred_fallthru
      _
    // Predicated region
    $region18: #{tpu_custom_call.1} parent=1 // pred_check
      _
    $region19: #{tpu_custom_call.1} parent=1 // pred_check_branch
      %1195 = sbr.rel (0) target = $region21
    $region20: #{tpu_custom_call.1} parent=1 // pred_region
      %1196 = dma.done [#allocation3], 4096
    $region21: #{tpu_custom_call.1} parent=1 // pred_fallthru
      _
    // Predicated region
    $region22: #{tpu_custom_call.1} parent=1 // pred_check
      _
    $region23: #{tpu_custom_call.1} parent=1 // pred_check_branch
      %1198 = sbr.rel (0) target = $region25
    $region24: #{tpu_custom_call.1} parent=1 // pred_region
      %1199 = dma.done [#allocation5], 32
    $region25: #{tpu_custom_call.1} parent=1 // pred_fallthru
      _
    %1200 = vsyncpa [#allocation3], 1
    %1201 = vsyncpa [#allocation5], 1

</llo_original>
